<compile_context>
chip_gen: v5e
topology: v5e:2x2
jax: 0.10.0
libtpu: 0.0.40
codegen_flags: <defaults>
</compile_context>

<pallas_src>
import jax
import jax.numpy as jnp
from jax.experimental import pallas as pl
from jax.experimental.pallas import tpu as pltpu

NCLS_PAD = 128  # lane-dense padded logits width


def _leaky(v):
    return jnp.where(v > 0, v, 0.01 * v)


def _pick_batch_block(B, C, cap=32):
    """Largest divisor of B (<= cap) whose row block BB*C is sublane (8) aligned."""
    for bb in range(min(B, cap), 0, -1):
        if B % bb == 0 and ((bb * C) % 8 == 0 or bb == B):
            return bb
    return B


def _pad_cols(m, mult=128):
    pad = (-m.shape[1]) % mult
    return jnp.pad(m, ((0, 0), (0, pad))) if pad else m


# ------------------------- kernel 1: Tception (heavy) -------------------------
def make_tception_kernel(num_T, Lps, pool):
    def kernel(x_ref, k1_ref, b1_ref, k2_ref, b2_ref, k3_ref, b3_ref, o_ref):
        x = x_ref[...]                                           # (BB*C, T)
        pooled = []
        for k_ref, b_ref, lp in ((k1_ref, b1_ref, Lps[0]),
                                 (k2_ref, b2_ref, Lps[1]),
                                 (k3_ref, b3_ref, Lps[2])):
            # Toeplitz conv (MXU) + bias + LeakyReLU.  Columns ordered (j, f, tp).
            a = jnp.dot(x, k_ref[...], preferred_element_type=jnp.float32) + b_ref[...]
            a = _leaky(a)
            blk = num_T * lp
            # AvgPool(1,8): 8 contiguous lane-slice adds (pool phase is the outer
            # column group thanks to the host-side column permutation of K).
            acc = a[:, 0:blk]
            for j in range(1, pool):
                acc = acc + a[:, j * blk:(j + 1) * blk]
            pooled.append(acc * (1.0 / pool))                    # (BB*C, num_T*lp)
        o_ref[...] = jnp.concatenate(pooled, axis=1)             # (BB*C, num_T*L)
    return kernel


# ------------------ kernel 2: fused Sception (+ folded BN_t) ------------------
def sception_kernel(z_ref, w_ref, b_ref, o_ref):
    s = jnp.dot(w_ref[...], z_ref[...], preferred_element_type=jnp.float32) + b_ref[...]
    o_ref[...] = _leaky(s)                                       # (3*num_S, B*L) lane-dense


# --------------- kernel 3: FC head (pool2 + BN_s folded into W1) ---------------
def fc_kernel(f_ref, w1_ref, b1_ref, w2_ref, b2_ref, o_ref):
    h = jnp.maximum(
        jnp.dot(f_ref[...], w1_ref[...], preferred_element_type=jnp.float32) + b1_ref[...],
        0.0)
    # TODO(synk): nn.Dropout is stochastic; eval-mode (identity) is used here.
    o_ref[...] = (jnp.dot(h, w2_ref[...], preferred_element_type=jnp.float32)
                  + b2_ref[...])                                 # (B, NCLS_PAD)


def tsception_pallas(x_nchw, p, sampling_rate, num_T, num_S, num_classes):
    B, _, C, T = x_nchw.shape
    Ch = C // 2
    ks = tuple(int(w * sampling_rate) for w in (0.5, 0.25, 0.125))
    pool_t, pool_s = 8, 2
    eps = 1e-5
    Lcs = [T - k + 1 for k in ks]
    Lps = [lc // pool_t for lc in Lcs]
    L = sum(Lps)
    L2 = L // pool_s
    hidden = p['Wfc1'].shape[0]
    nrs = 3 * num_S
    assert num_classes <= NCLS_PAD

    x2d = x_nchw.reshape(B * C, T).astype(jnp.float32)

    # ---- BN eval-mode affines (optional running stats; defaults mean=0, var=1) ----
    rm_t = p.get('rm_t', jnp.zeros((num_T,), jnp.float32))
    rv_t = p.get('rv_t', jnp.ones((num_T,), jnp.float32))
    rm_s = p.get('rm_s', jnp.zeros((num_S,), jnp.float32))
    rv_s = p.get('rv_s', jnp.ones((num_S,), jnp.float32))
    scale_t = p['g_t'] / jnp.sqrt(rv_t + eps)
    shift_t = p['b_t'] - rm_t * scale_t
    scale_s = p['g_s'] / jnp.sqrt(rv_s + eps)
    shift_s = p['b_s'] - rm_s * scale_s

    # ---- host-built per-branch Toeplitz matrices, truncated to the pooled extent and
    #      column-permuted to (pool-phase j, filter f, pooled-time tp) ----
    def toeplitz_branch(w, lp):
        nT, k = w.shape
        Lu = lp * pool_t
        j = jnp.arange(T)[:, None] - jnp.arange(Lu)[None, :]
        valid = (j >= 0) & (j < k)
        K = jnp.where(valid[None], w[:, jnp.clip(j, 0, k - 1)], 0.0)     # (nT, T, Lu)
        K = jnp.transpose(K, (1, 0, 2)).reshape(T, nT, lp, pool_t)       # t' = tp*8 + j
        return jnp.transpose(K, (0, 3, 1, 2)).reshape(T, pool_t * nT * lp)

    Ks, bks = [], []
    for wkey, bkey, lp in (('WT1', 'bT1', Lps[0]), ('WT2', 'bT2', Lps[1]),
                           ('WT3', 'bT3', Lps[2])):
        Ks.append(_pad_cols(toeplitz_branch(p[wkey][:, 0, 0, :], lp)))
        bks.append(_pad_cols(jnp.tile(jnp.repeat(p[bkey], lp), pool_t)[None, :]))

    # ---- fused Sception weight (BN_t folded in); rows (r, s), cols (f, c) ----
    WS1 = p['WS1'][..., 0]                                    # (num_S, num_T, C)
    WS2 = p['WS2'][..., 0]                                    # (num_S, num_T, Ch)
    ws1 = WS1 * scale_t[None, :, None]
    ws2 = WS2 * scale_t[None, :, None]
    w_top = jnp.zeros((num_S, num_T, C), jnp.float32).at[:, :, :Ch].set(ws2)
    w_bot = jnp.zeros((num_S, num_T, C), jnp.float32).at[:, :, Ch:].set(ws2)
    Wsf = jnp.concatenate([ws1, w_top, w_bot], axis=0).reshape(nrs, num_T * C)
    b2s = p['bS2'] + jnp.einsum('sfc,f->s', WS2, shift_t)
    bsf = jnp.concatenate(
        [p['bS1'] + jnp.einsum('sfc,f->s', WS1, shift_t), b2s, b2s], axis=0)[:, None]

    # ---- FC1 with AvgPool(1,2) and BN_s folded in; rows ordered (t, r, s) ----
    W1_4d = p['Wfc1'].reshape(hidden, num_S, 3, L2)           # (h, s, r, t2)
    W1rep = jnp.repeat(W1_4d * (0.5 * scale_s)[None, :, None, None], 2, axis=-1)
    if 2 * L2 < L:                                            # AvgPool truncation tail
        W1rep = jnp.pad(W1rep, ((0, 0), (0, 0), (0, 0), (0, L - 2 * L2)))
    W1e = jnp.transpose(W1rep, (3, 2, 1, 0)).reshape(L * nrs, hidden)
    b1e = (p['bfc1'] + jnp.einsum('hsrt,s->h', W1_4d, shift_s))[None, :]
    W2p = jnp.zeros((hidden, NCLS_PAD), jnp.float32).at[:, :num_classes].set(p['Wfc2'].T)
    b2p = jnp.zeros((1, NCLS_PAD), jnp.float32).at[0, :num_classes].set(p['bfc2'])

    vmem_limit = 64 * 1024 * 1024

    # ---- kernel 1: Tception, gridded over batch blocks (megacore-parallel) ----
    BB = _pick_batch_block(B, C)
    row_blk = BB * C
    FL = num_T * L

    def wspec(shape):
        return pl.BlockSpec(shape, lambda i: (0, 0))

    z = pl.pallas_call(
        make_tception_kernel(num_T, Lps, pool_t),
        out_shape=jax.ShapeDtypeStruct((B * C, FL), jnp.float32),
        grid=(B // BB,),
        in_specs=[pl.BlockSpec((row_blk, T), lambda i: (i, 0)),
                  wspec(Ks[0].shape), wspec(bks[0].shape),
                  wspec(Ks[1].shape), wspec(bks[1].shape),
                  wspec(Ks[2].shape), wspec(bks[2].shape)],
        out_specs=pl.BlockSpec((row_blk, FL), lambda i: (i, 0)),
        compiler_params=pltpu.CompilerParams(
            dimension_semantics=("parallel",),
            vmem_limit_bytes=vmem_limit),
    )(x2d, Ks[0], bks[0], Ks[1], bks[1], Ks[2], bks[2])

    # ---- XLA re-layout (hoisted out of the kernel, per review):
    #      (b*C+c, [branch|f|tp]) -> (f*C+c, b*L+t) ----
    parts, off = [], 0
    for lp in Lps:
        parts.append(z[:, off:off + num_T * lp].reshape(B, C, num_T, lp))
        off += num_T * lp
    z4 = jnp.concatenate(parts, axis=-1)                      # (B, C, num_T, L)
    zs = jnp.transpose(z4, (2, 1, 0, 3)).reshape(num_T * C, B * L)

    # ---- kernel 2: fused Sception matmul + LeakyReLU (lane-dense (b,t) output) ----
    vmem = pl.BlockSpec(memory_space=pltpu.MemorySpace.VMEM)
    s_out = pl.pallas_call(
        sception_kernel,
        out_shape=jax.ShapeDtypeStruct((nrs, B * L), jnp.float32),
        in_specs=[vmem] * 3,
        out_specs=vmem,
        compiler_params=pltpu.CompilerParams(vmem_limit_bytes=vmem_limit),
    )(zs, Wsf, bsf)

    # ---- XLA re-layout for the FC input: (rs, b*L+t) -> (b, t*nrs + rs) ----
    feat = jnp.transpose(s_out.reshape(nrs, B, L), (1, 2, 0)).reshape(B, L * nrs)

    # ---- kernel 3: FC head (AvgPool(1,2) + BN_s already folded into W1e) ----
    logits = pl.pallas_call(
        fc_kernel,
        out_shape=jax.ShapeDtypeStruct((B, NCLS_PAD), jnp.float32),
        in_specs=[vmem] * 5,
        out_specs=vmem,
        compiler_params=pltpu.CompilerParams(vmem_limit_bytes=vmem_limit),
    )(feat, W1e, b1e, W2p, b2p)
    return logits[:, :num_classes]


# ---------------- pure-JAX reference (eval-mode forward) ----------------
def reference_forward(x, p, sampling_rate, num_T, num_S, C):
    eps = 1e-5
    Ch = C // 2

    def conv2d(xin, w, stride=(1, 1)):
        return jax.lax.conv_general_dilated(
            xin, w, window_strides=stride, padding='VALID',
            dimension_numbers=('NCHW', 'OIHW', 'NCHW'))

    def avgpool_w(y, pool):
        Bb, Cc, H, W = y.shape
        Lp = W // pool
        return y[..., :Lp * pool].reshape(Bb, Cc, H, Lp, pool).mean(-1)

    def block(xin, w, b, pool, stride=(1, 1)):
        y = conv2d(xin, w, stride) + b[None, :, None, None]
        return avgpool_w(_leaky(y), pool)

    y1 = block(x, p['WT1'], p['bT1'], 8)
    y2 = block(x, p['WT2'], p['bT2'], 8)
    y3 = block(x, p['WT3'], p['bT3'], 8)
    out = jnp.concatenate([y1, y2, y3], axis=-1)
    out = out / jnp.sqrt(1.0 + eps) * p['g_t'][None, :, None, None] \
        + p['b_t'][None, :, None, None]

    z1 = block(out, p['WS1'], p['bS1'], 2)
    z2 = block(out, p['WS2'], p['bS2'], 2, stride=(Ch, 1))
    out_ = jnp.concatenate([z1, z2], axis=2)
    out_ = out_ / jnp.sqrt(1.0 + eps) * p['g_s'][None, :, None, None] \
        + p['b_s'][None, :, None, None]

    flat = out_.reshape(out_.shape[0], -1)
    h = jnp.maximum(flat @ p['Wfc1'].T + p['bfc1'], 0.0)
    return h @ p['Wfc2'].T + p['bfc2']


if __name__ == "__main__":
    B = 2
    C_eeg, T = 4, 128                 # input_size = (1, 4, 128)
    sampling_rate = 32                # -> Tception kernels (1,16), (1,8), (1,4)
    num_T, num_S, hidden, num_classes = 4, 4, 32, 3
    Ch = C_eeg // 2

    ks = tuple(int(w * sampling_rate) for w in (0.5, 0.25, 0.125))
    Lps = [(T - k + 1) // 8 for k in ks]
    L = sum(Lps)
    L2 = L // 2
    F = num_S * 3 * L2                # flattened feature size feeding the FC head

    key = jax.random.PRNGKey(0)
    keys = jax.random.split(key, 20)

    def rnd(k, shape, scale=0.1):
        return scale * jax.random.normal(k, shape, dtype=jnp.float32)

    p = {
        'WT1': rnd(keys[0], (num_T, 1, 1, ks[0])), 'bT1': rnd(keys[1], (num_T,)),
        'WT2': rnd(keys[2], (num_T, 1, 1, ks[1])), 'bT2': rnd(keys[3], (num_T,)),
        'WT3': rnd(keys[4], (num_T, 1, 1, ks[2])), 'bT3': rnd(keys[5], (num_T,)),
        'g_t': 1.0 + rnd(keys[6], (num_T,)),       'b_t': rnd(keys[7], (num_T,)),
        'WS1': rnd(keys[8], (num_S, num_T, C_eeg, 1)), 'bS1': rnd(keys[9], (num_S,)),
        'WS2': rnd(keys[10], (num_S, num_T, Ch, 1)),   'bS2': rnd(keys[11], (num_S,)),
        'g_s': 1.0 + rnd(keys[12], (num_S,)),      'b_s': rnd(keys[13], (num_S,)),
        'Wfc1': rnd(keys[14], (hidden, F)),        'bfc1': rnd(keys[15], (hidden,)),
        'Wfc2': rnd(keys[16], (num_classes, hidden)), 'bfc2': rnd(keys[17], (num_classes,)),
    }

    x = rnd(keys[18], (B, 1, C_eeg, T), scale=1.0)

    out = tsception_pallas(x, p, sampling_rate, num_T, num_S, num_classes)
    out = jax.block_until_ready(out)

    ref = reference_forward(x, p, sampling_rate, num_T, num_S, C_eeg)
    err = float(jnp.max(jnp.abs(out - ref)))
    assert out.shape == (B, num_classes)
    # Toeplitz-matmul reassociation vs the XLA conv reference perturbs rounding at the
    # ~1e-3 level; 5e-3 keeps a meaningful correctness margin.
    assert err < 5e-3, f"max abs err {err}"
    print("KERNEL_OK")
</pallas_src>

<mosaic_0001>
module attributes {stable_mosaic.version = 11 : i64} {
  func.func @kernel(%arg0: i32, %arg1: memref<8x128xf32, #tpu.memory_space<vmem>>, %arg2: memref<128x512xf32, #tpu.memory_space<vmem>>, %arg3: memref<1x512xf32, #tpu.memory_space<vmem>>, %arg4: memref<128x512xf32, #tpu.memory_space<vmem>>, %arg5: memref<1x512xf32, #tpu.memory_space<vmem>>, %arg6: memref<128x512xf32, #tpu.memory_space<vmem>>, %arg7: memref<1x512xf32, #tpu.memory_space<vmem>>, %arg8: memref<8x176xf32, #tpu.memory_space<vmem>>) attributes {dimension_semantics = [#tpu.dimension_semantics<parallel>], iteration_bounds = array<i64: 1>, scalar_prefetch = 0 : i64, scratch_operands = 0 : i64, tpu.core_type = #tpu.core_type<tc>, window_params = [{transform_indices = @transform_0, window_bounds = array<i64: 8, 128>}, {pipeline_mode = #tpu.pipeline_mode<synchronous>, transform_indices = @transform_1, window_bounds = array<i64: 128, 512>}, {pipeline_mode = #tpu.pipeline_mode<synchronous>, transform_indices = @transform_2, window_bounds = array<i64: 1, 512>}, {pipeline_mode = #tpu.pipeline_mode<synchronous>, transform_indices = @transform_3, window_bounds = array<i64: 128, 512>}, {pipeline_mode = #tpu.pipeline_mode<synchronous>, transform_indices = @transform_4, window_bounds = array<i64: 1, 512>}, {pipeline_mode = #tpu.pipeline_mode<synchronous>, transform_indices = @transform_5, window_bounds = array<i64: 128, 512>}, {pipeline_mode = #tpu.pipeline_mode<synchronous>, transform_indices = @transform_6, window_bounds = array<i64: 1, 512>}, {transform_indices = @transform_7, window_bounds = array<i64: 8, 176>}]} {
    %c0 = arith.constant 0 : index
    %c0_0 = arith.constant 0 : index
    %0 = vector.load %arg1[%c0, %c0_0] : memref<8x128xf32, #tpu.memory_space<vmem>>, vector<8x128xf32>
    %c0_1 = arith.constant 0 : index
    %c0_2 = arith.constant 0 : index
    %1 = vector.load %arg2[%c0_1, %c0_2] : memref<128x512xf32, #tpu.memory_space<vmem>>, vector<128x512xf32>
    %cst = arith.constant dense<0.000000e+00> : vector<8x512xf32>
    %2 = tpu.matmul %0, %1, %cst {dimension_numbers = #tpu.dot_dimension_numbers<[1], [0], [0], [1], [0, 0, 1, 1], [], []>} : vector<8x128xf32>, vector<128x512xf32>, vector<8x512xf32> -> vector<8x512xf32>
    %c0_3 = arith.constant 0 : index
    %c0_4 = arith.constant 0 : index
    %3 = vector.load %arg3[%c0_3, %c0_4] : memref<1x512xf32, #tpu.memory_space<vmem>>, vector<1x512xf32>
    %4 = vector.broadcast %3 : vector<1x512xf32> to vector<8x512xf32>
    %5 = arith.addf %2, %4 : vector<8x512xf32>
    %cst_5 = arith.constant 0.000000e+00 : f32
    %6 = vector.broadcast %cst_5 : f32 to vector<8x512xf32>
    %7 = arith.cmpf ogt, %5, %6 : vector<8x512xf32>
    %cst_6 = arith.constant 0.00999999977 : f32
    %8 = vector.broadcast %cst_6 : f32 to vector<8x512xf32>
    %9 = arith.mulf %8, %5 : vector<8x512xf32>
    %10 = arith.select %7, %5, %9 : vector<8x512xi1>, vector<8x512xf32>
    %11 = vector.extract_strided_slice %10 {offsets = [0, 0], sizes = [8, 56], strides = [1, 1]} : vector<8x512xf32> to vector<8x56xf32>
    %12 = vector.extract_strided_slice %10 {offsets = [0, 56], sizes = [8, 56], strides = [1, 1]} : vector<8x512xf32> to vector<8x56xf32>
    %13 = arith.addf %11, %12 : vector<8x56xf32>
    %14 = vector.extract_strided_slice %10 {offsets = [0, 112], sizes = [8, 56], strides = [1, 1]} : vector<8x512xf32> to vector<8x56xf32>
    %15 = arith.addf %13, %14 : vector<8x56xf32>
    %16 = vector.extract_strided_slice %10 {offsets = [0, 168], sizes = [8, 56], strides = [1, 1]} : vector<8x512xf32> to vector<8x56xf32>
    %17 = arith.addf %15, %16 : vector<8x56xf32>
    %18 = vector.extract_strided_slice %10 {offsets = [0, 224], sizes = [8, 56], strides = [1, 1]} : vector<8x512xf32> to vector<8x56xf32>
    %19 = arith.addf %17, %18 : vector<8x56xf32>
    %20 = vector.extract_strided_slice %10 {offsets = [0, 280], sizes = [8, 56], strides = [1, 1]} : vector<8x512xf32> to vector<8x56xf32>
    %21 = arith.addf %19, %20 : vector<8x56xf32>
    %22 = vector.extract_strided_slice %10 {offsets = [0, 336], sizes = [8, 56], strides = [1, 1]} : vector<8x512xf32> to vector<8x56xf32>
    %23 = arith.addf %21, %22 : vector<8x56xf32>
    %24 = vector.extract_strided_slice %10 {offsets = [0, 392], sizes = [8, 56], strides = [1, 1]} : vector<8x512xf32> to vector<8x56xf32>
    %25 = arith.addf %23, %24 : vector<8x56xf32>
    %cst_7 = arith.constant 1.250000e-01 : f32
    %26 = vector.broadcast %cst_7 : f32 to vector<8x56xf32>
    %27 = arith.mulf %25, %26 : vector<8x56xf32>
    %c0_8 = arith.constant 0 : index
    %c0_9 = arith.constant 0 : index
    %28 = vector.load %arg4[%c0_8, %c0_9] : memref<128x512xf32, #tpu.memory_space<vmem>>, vector<128x512xf32>
    %cst_10 = arith.constant dense<0.000000e+00> : vector<8x512xf32>
    %29 = tpu.matmul %0, %28, %cst_10 {dimension_numbers = #tpu.dot_dimension_numbers<[1], [0], [0], [1], [0, 0, 1, 1], [], []>} : vector<8x128xf32>, vector<128x512xf32>, vector<8x512xf32> -> vector<8x512xf32>
    %c0_11 = arith.constant 0 : index
    %c0_12 = arith.constant 0 : index
    %30 = vector.load %arg5[%c0_11, %c0_12] : memref<1x512xf32, #tpu.memory_space<vmem>>, vector<1x512xf32>
    %31 = vector.broadcast %30 : vector<1x512xf32> to vector<8x512xf32>
    %32 = arith.addf %29, %31 : vector<8x512xf32>
    %cst_13 = arith.constant 0.000000e+00 : f32
    %33 = vector.broadcast %cst_13 : f32 to vector<8x512xf32>
    %34 = arith.cmpf ogt, %32, %33 : vector<8x512xf32>
    %cst_14 = arith.constant 0.00999999977 : f32
    %35 = vector.broadcast %cst_14 : f32 to vector<8x512xf32>
    %36 = arith.mulf %35, %32 : vector<8x512xf32>
    %37 = arith.select %34, %32, %36 : vector<8x512xi1>, vector<8x512xf32>
    %38 = vector.extract_strided_slice %37 {offsets = [0, 0], sizes = [8, 60], strides = [1, 1]} : vector<8x512xf32> to vector<8x60xf32>
    %39 = vector.extract_strided_slice %37 {offsets = [0, 60], sizes = [8, 60], strides = [1, 1]} : vector<8x512xf32> to vector<8x60xf32>
    %40 = arith.addf %38, %39 : vector<8x60xf32>
    %41 = vector.extract_strided_slice %37 {offsets = [0, 120], sizes = [8, 60], strides = [1, 1]} : vector<8x512xf32> to vector<8x60xf32>
    %42 = arith.addf %40, %41 : vector<8x60xf32>
    %43 = vector.extract_strided_slice %37 {offsets = [0, 180], sizes = [8, 60], strides = [1, 1]} : vector<8x512xf32> to vector<8x60xf32>
    %44 = arith.addf %42, %43 : vector<8x60xf32>
    %45 = vector.extract_strided_slice %37 {offsets = [0, 240], sizes = [8, 60], strides = [1, 1]} : vector<8x512xf32> to vector<8x60xf32>
    %46 = arith.addf %44, %45 : vector<8x60xf32>
    %47 = vector.extract_strided_slice %37 {offsets = [0, 300], sizes = [8, 60], strides = [1, 1]} : vector<8x512xf32> to vector<8x60xf32>
    %48 = arith.addf %46, %47 : vector<8x60xf32>
    %49 = vector.extract_strided_slice %37 {offsets = [0, 360], sizes = [8, 60], strides = [1, 1]} : vector<8x512xf32> to vector<8x60xf32>
    %50 = arith.addf %48, %49 : vector<8x60xf32>
    %51 = vector.extract_strided_slice %37 {offsets = [0, 420], sizes = [8, 60], strides = [1, 1]} : vector<8x512xf32> to vector<8x60xf32>
    %52 = arith.addf %50, %51 : vector<8x60xf32>
    %cst_15 = arith.constant 1.250000e-01 : f32
    %53 = vector.broadcast %cst_15 : f32 to vector<8x60xf32>
    %54 = arith.mulf %52, %53 : vector<8x60xf32>
    %c0_16 = arith.constant 0 : index
    %c0_17 = arith.constant 0 : index
    %55 = vector.load %arg6[%c0_16, %c0_17] : memref<128x512xf32, #tpu.memory_space<vmem>>, vector<128x512xf32>
    %cst_18 = arith.constant dense<0.000000e+00> : vector<8x512xf32>
    %56 = tpu.matmul %0, %55, %cst_18 {dimension_numbers = #tpu.dot_dimension_numbers<[1], [0], [0], [1], [0, 0, 1, 1], [], []>} : vector<8x128xf32>, vector<128x512xf32>, vector<8x512xf32> -> vector<8x512xf32>
    %c0_19 = arith.constant 0 : index
    %c0_20 = arith.constant 0 : index
    %57 = vector.load %arg7[%c0_19, %c0_20] : memref<1x512xf32, #tpu.memory_space<vmem>>, vector<1x512xf32>
    %58 = vector.broadcast %57 : vector<1x512xf32> to vector<8x512xf32>
    %59 = arith.addf %56, %58 : vector<8x512xf32>
    %cst_21 = arith.constant 0.000000e+00 : f32
    %60 = vector.broadcast %cst_21 : f32 to vector<8x512xf32>
    %61 = arith.cmpf ogt, %59, %60 : vector<8x512xf32>
    %cst_22 = arith.constant 0.00999999977 : f32
    %62 = vector.broadcast %cst_22 : f32 to vector<8x512xf32>
    %63 = arith.mulf %62, %59 : vector<8x512xf32>
    %64 = arith.select %61, %59, %63 : vector<8x512xi1>, vector<8x512xf32>
    %65 = vector.extract_strided_slice %64 {offsets = [0, 0], sizes = [8, 60], strides = [1, 1]} : vector<8x512xf32> to vector<8x60xf32>
    %66 = vector.extract_strided_slice %64 {offsets = [0, 60], sizes = [8, 60], strides = [1, 1]} : vector<8x512xf32> to vector<8x60xf32>
    %67 = arith.addf %65, %66 : vector<8x60xf32>
    %68 = vector.extract_strided_slice %64 {offsets = [0, 120], sizes = [8, 60], strides = [1, 1]} : vector<8x512xf32> to vector<8x60xf32>
    %69 = arith.addf %67, %68 : vector<8x60xf32>
    %70 = vector.extract_strided_slice %64 {offsets = [0, 180], sizes = [8, 60], strides = [1, 1]} : vector<8x512xf32> to vector<8x60xf32>
    %71 = arith.addf %69, %70 : vector<8x60xf32>
    %72 = vector.extract_strided_slice %64 {offsets = [0, 240], sizes = [8, 60], strides = [1, 1]} : vector<8x512xf32> to vector<8x60xf32>
    %73 = arith.addf %71, %72 : vector<8x60xf32>
    %74 = vector.extract_strided_slice %64 {offsets = [0, 300], sizes = [8, 60], strides = [1, 1]} : vector<8x512xf32> to vector<8x60xf32>
    %75 = arith.addf %73, %74 : vector<8x60xf32>
    %76 = vector.extract_strided_slice %64 {offsets = [0, 360], sizes = [8, 60], strides = [1, 1]} : vector<8x512xf32> to vector<8x60xf32>
    %77 = arith.addf %75, %76 : vector<8x60xf32>
    %78 = vector.extract_strided_slice %64 {offsets = [0, 420], sizes = [8, 60], strides = [1, 1]} : vector<8x512xf32> to vector<8x60xf32>
    %79 = arith.addf %77, %78 : vector<8x60xf32>
    %cst_23 = arith.constant 1.250000e-01 : f32
    %80 = vector.broadcast %cst_23 : f32 to vector<8x60xf32>
    %81 = arith.mulf %79, %80 : vector<8x60xf32>
    %82 = tpu.concatenate %27, %54, %81 in 1 : vector<8x56xf32>, vector<8x60xf32>, vector<8x60xf32> -> vector<8x176xf32>
    %c0_24 = arith.constant 0 : index
    %c0_25 = arith.constant 0 : index
    %83 = vector.load %arg8[%c0_24, %c0_25] : memref<8x176xf32, #tpu.memory_space<vmem>>, vector<8x176xf32>
    tpu.vector_store %arg8[%c0_24, %c0_25], %82 {strides = array<i32>} : memref<8x176xf32, #tpu.memory_space<vmem>>, vector<8x176xf32>,
    return
  }
  func.func @transform_0(%arg0: i32) -> (i32, i32) {
    %c0_i32 = arith.constant 0 : i32
    %c0_i32_0 = arith.constant 0 : i32
    return %arg0, %c0_i32 : i32, i32
  }
  func.func @transform_1(%arg0: i32) -> (i32, i32) {
    %c0_i32 = arith.constant 0 : i32
    %c0_i32_0 = arith.constant 0 : i32
    %c0_i32_1 = arith.constant 0 : i32
    return %c0_i32, %c0_i32_0 : i32, i32
  }
  func.func @transform_2(%arg0: i32) -> (i32, i32) {
    %c0_i32 = arith.constant 0 : i32
    %c0_i32_0 = arith.constant 0 : i32
    %c0_i32_1 = arith.constant 0 : i32
    return %c0_i32, %c0_i32_0 : i32, i32
  }
  func.func @transform_3(%arg0: i32) -> (i32, i32) {
    %c0_i32 = arith.constant 0 : i32
    %c0_i32_0 = arith.constant 0 : i32
    %c0_i32_1 = arith.constant 0 : i32
    return %c0_i32, %c0_i32_0 : i32, i32
  }
  func.func @transform_4(%arg0: i32) -> (i32, i32) {
    %c0_i32 = arith.constant 0 : i32
    %c0_i32_0 = arith.constant 0 : i32
    %c0_i32_1 = arith.constant 0 : i32
    return %c0_i32, %c0_i32_0 : i32, i32
  }
  func.func @transform_5(%arg0: i32) -> (i32, i32) {
    %c0_i32 = arith.constant 0 : i32
    %c0_i32_0 = arith.constant 0 : i32
    %c0_i32_1 = arith.constant 0 : i32
    return %c0_i32, %c0_i32_0 : i32, i32
  }
  func.func @transform_6(%arg0: i32) -> (i32, i32) {
    %c0_i32 = arith.constant 0 : i32
    %c0_i32_0 = arith.constant 0 : i32
    %c0_i32_1 = arith.constant 0 : i32
    return %c0_i32, %c0_i32_0 : i32, i32
  }
  func.func @transform_7(%arg0: i32) -> (i32, i32) {
    %c0_i32 = arith.constant 0 : i32
    %c0_i32_0 = arith.constant 0 : i32
    return %arg0, %c0_i32 : i32, i32
  }
}

</mosaic_0001>

<llo_original>
// kernel: tpu_custom_call.1
$region0: #{tpu_custom_call.1}
  #allocation0 [shape = 'u32[]', space=smem, size = 0x4, offset = 0x4, fixed_abs, tag = 'smem constant byte address 0x4 - core index']
  #allocation1 [shape = 'u32[72,128]{1,0:T(1,128)}', space=vmem, size = 0x9000, scoped, tag = 'internal scratch']
  %s0 = inlined_call_operand.hbm [shape: f32[8,128], index: 0, kind: input, shape index: {}]
  %s1 = inlined_call_operand.hbm [shape: f32[128,512], index: 1, kind: input, shape index: {}]
  %s2 = inlined_call_operand.hbm [shape: f32[1,512], index: 2, kind: input, shape index: {}]
  %s3 = inlined_call_operand.hbm [shape: f32[128,512], index: 3, kind: input, shape index: {}]
  %s4 = inlined_call_operand.hbm [shape: f32[1,512], index: 4, kind: input, shape index: {}]
  %s5 = inlined_call_operand.hbm [shape: f32[128,512], index: 5, kind: input, shape index: {}]
  %s6 = inlined_call_operand.vmem [shape: f32[1,512], index: 6, kind: input, shape index: {}]
  %s7 = inlined_call_operand.hbm [shape: f32[8,176], index: 7, kind: output, shape index: {}]
  %s8 = sld [smem:[#allocation0]]
  $region62: #{tpu_custom_call.1} parent=0
    _
  %s10 = ssub.s32 1, %s8
  %s11 = scalar_select 0, %s10, %s8
  $region1: #{tpu_custom_call.1} parent=0
    #allocation2 [shape = 'u8[4096]{0}', space=vmem, size = 0x1000, scoped, tag = 'input window, operand 0, single buffered']
    #allocation3 [shape = 's32[1]{0}', space=sflag, size = 0x4, scoped, tag = 'scoped memory for tpu_custom_call.1']
    #allocation4 [shape = 's32[1]{0}', space=sflag, size = 0x4, scoped, tag = 'scoped memory for tpu_custom_call.1']
    #allocation5 [shape = 'u8[262144]{0}', space=vmem, size = 0x40000, scoped, tag = 'input window, operand 1, single buffered']
    #allocation6 [shape = 's32[1]{0}', space=sflag, size = 0x4, scoped, tag = 'scoped memory for tpu_custom_call.1']
    #allocation7 [shape = 'u8[2048]{0}', space=vmem, size = 0x800, scoped, tag = 'input window, operand 2, single buffered']
    #allocation8 [shape = 'u8[262144]{0}', space=vmem, size = 0x40000, scoped, tag = 'input window, operand 3, single buffered']
    #allocation9 [shape = 's32[1]{0}', space=sflag, size = 0x4, scoped, tag = 'scoped memory for tpu_custom_call.1']
    #allocation10 [shape = 'u8[2048]{0}', space=vmem, size = 0x800, scoped, tag = 'input window, operand 4, single buffered']
    #allocation11 [shape = 'u8[262144]{0}', space=vmem, size = 0x40000, scoped, tag = 'input window, operand 5, single buffered']
    #allocation12 [shape = 's32[1]{0}', space=sflag, size = 0x4, scoped, tag = 'scoped memory for tpu_custom_call.1']
    #allocation13 [shape = 'u8[8192]{0}', space=vmem, size = 0x2000, scoped, tag = 'output window, operand 0, single buffered']
    %12 = vsyncpa [#allocation3], 0
    %13 = vsyncpa [#allocation6], 0
    %14 = vsyncpa [#allocation9], 0
    %15 = vsyncpa [#allocation12], 0
    %16 = vsyncpa [#allocation4], 0
    // Predicated region
    $region2: #{tpu_custom_call.1} parent=1 // pred_check
      _
    $region3: #{tpu_custom_call.1} parent=1 // pred_check_branch
      %18 = sbr.rel (0) target = $region5
    $region4: #{tpu_custom_call.1} parent=1 // pred_region
      %20 = vsyncadd [#allocation3], 0
      %s22 = sshll.u32 %s0, 4
      %s23 = int_to_ptr.hbm [resolvable:$true] %s22
      %s24 = sshll.u32 [#allocation2], 4
      %s25 = int_to_ptr.vmem [resolvable:$true] %s24
      %27 = dma.hbm_to_vmem [thread:$0]  %s23, 128, %s25, [#allocation3]
    $region5: #{tpu_custom_call.1} parent=1 // pred_fallthru
      _
    // Predicated region
    $region6: #{tpu_custom_call.1} parent=1 // pred_check
      _
    $region7: #{tpu_custom_call.1} parent=1 // pred_check_branch
      %29 = sbr.rel (0) target = $region9
    $region8: #{tpu_custom_call.1} parent=1 // pred_region
      %31 = vsyncadd [#allocation6], 0
      %s32 = sshll.u32 %s1, 4
      %s33 = int_to_ptr.hbm [resolvable:$true] %s32
      %s34 = sshll.u32 [#allocation5], 4
      %s35 = int_to_ptr.vmem [resolvable:$true] %s34
      %40 = dma.hbm_to_vmem [thread:$0]  %s33, 8192, %s35, [#allocation6], 512, 512, 32
    $region9: #{tpu_custom_call.1} parent=1 // pred_fallthru
      _
    // Predicated region
    $region10: #{tpu_custom_call.1} parent=1 // pred_check
      _
    $region11: #{tpu_custom_call.1} parent=1 // pred_check_branch
      %42 = sbr.rel (0) target = $region13
    $region12: #{tpu_custom_call.1} parent=1 // pred_region
      %44 = vsyncadd [#allocation6], 0
      %s46 = sshll.u32 %s2, 4
      %s47 = int_to_ptr.hbm [resolvable:$true] %s46
      %s48 = sshll.u32 [#allocation7], 4
      %s49 = int_to_ptr.vmem [resolvable:$true] %s48
      %51 = dma.hbm_to_vmem [thread:$0]  %s47, 64, %s49, [#allocation6]
    $region13: #{tpu_custom_call.1} parent=1 // pred_fallthru
      _
    // Predicated region
    $region14: #{tpu_custom_call.1} parent=1 // pred_check
      _
    $region15: #{tpu_custom_call.1} parent=1 // pred_check_branch
      %53 = sbr.rel (0) target = $region17
    $region16: #{tpu_custom_call.1} parent=1 // pred_region
      %55 = vsyncadd [#allocation9], 0
      %s56 = sshll.u32 %s3, 4
      %s57 = int_to_ptr.hbm [resolvable:$true] %s56
      %s58 = sshll.u32 [#allocation8], 4
      %s59 = int_to_ptr.vmem [resolvable:$true] %s58
      %64 = dma.hbm_to_vmem [thread:$0]  %s57, 8192, %s59, [#allocation9], 512, 512, 32
    $region17: #{tpu_custom_call.1} parent=1 // pred_fallthru
      _
    // Predicated region
    $region18: #{tpu_custom_call.1} parent=1 // pred_check
      _
    $region19: #{tpu_custom_call.1} parent=1 // pred_check_branch
      %66 = sbr.rel (0) target = $region21
    $region20: #{tpu_custom_call.1} parent=1 // pred_region
      %68 = vsyncadd [#allocation9], 0
      %s70 = sshll.u32 %s4, 4
      %s71 = int_to_ptr.hbm [resolvable:$true] %s70
      %s72 = sshll.u32 [#allocation10], 4
      %s73 = int_to_ptr.vmem [resolvable:$true] %s72
      %75 = dma.hbm_to_vmem [thread:$0]  %s71, 64, %s73, [#allocation9]
    $region21: #{tpu_custom_call.1} parent=1 // pred_fallthru
      _
    // Predicated region
    $region22: #{tpu_custom_call.1} parent=1 // pred_check
      _
    $region23: #{tpu_custom_call.1} parent=1 // pred_check_branch
      %77 = sbr.rel (0) target = $region25
    $region24: #{tpu_custom_call.1} parent=1 // pred_region
      %79 = vsyncadd [#allocation12], 0
      %s80 = sshll.u32 %s5, 4
      %s81 = int_to_ptr.hbm [resolvable:$true] %s80
      %s82 = sshll.u32 [#allocation11], 4
      %s83 = int_to_ptr.vmem [resolvable:$true] %s82
      %88 = dma.hbm_to_vmem [thread:$0]  %s81, 8192, %s83, [#allocation12], 512, 512, 32
    $region25: #{tpu_custom_call.1} parent=1 // pred_fallthru
      _
    // Predicated region
    $region26: #{tpu_custom_call.1} parent=1 // pred_check
      _
    $region27: #{tpu_custom_call.1} parent=1 // pred_check_branch
      %90 = sbr.rel (0) target = $region29
    $region28: #{tpu_custom_call.1} parent=1 // pred_region
      _
    $region29: #{tpu_custom_call.1} parent=1 // pred_fallthru
      _
    // Predicated region
    $region30: #{tpu_custom_call.1} parent=1 // pred_check
      _
    $region31: #{tpu_custom_call.1} parent=1 // pred_check_branch
      %92 = sbr.rel (0) target = $region33
    $region32: #{tpu_custom_call.1} parent=1 // pred_region
      %94 = dma.done [#allocation3], 128
    $region33: #{tpu_custom_call.1} parent=1 // pred_fallthru
      _
    // Predicated region
    $region34: #{tpu_custom_call.1} parent=1 // pred_check
      _
    $region35: #{tpu_custom_call.1} parent=1 // pred_check_branch
      %96 = sbr.rel (0) target = $region37
    $region36: #{tpu_custom_call.1} parent=1 // pred_region
      %98 = dma.done [#allocation6], 8192
    $region37: #{tpu_custom_call.1} parent=1 // pred_fallthru
      _
    // Predicated region
    $region38: #{tpu_custom_call.1} parent=1 // pred_check
      _
    $region39: #{tpu_custom_call.1} parent=1 // pred_check_branch
      %100 = sbr.rel (0) target = $region41
    $region40: #{tpu_custom_call.1} parent=1 // pred_region
      %102 = dma.done [#allocation6], 64
    $region41: #{tpu_custom_call.1} parent=1 // pred_fallthru
      _
    // Predicated region
    $region42: #{tpu_custom_call.1} parent=1 // pred_check
      _
    $region43: #{tpu_custom_call.1} parent=1 // pred_check_branch
      %104 = sbr.rel (0) target = $region45
    $region44: #{tpu_custom_call.1} parent=1 // pred_region
      %106 = dma.done [#allocation9], 8192
    $region45: #{tpu_custom_call.1} parent=1 // pred_fallthru
      _
    // Predicated region
    $region46: #{tpu_custom_call.1} parent=1 // pred_check
      _
    $region47: #{tpu_custom_call.1} parent=1 // pred_check_branch
      %108 = sbr.rel (0) target = $region49
    $region48: #{tpu_custom_call.1} parent=1 // pred_region
      %110 = dma.done [#allocation9], 64
    $region49: #{tpu_custom_call.1} parent=1 // pred_fallthru
      _
    // Predicated region
    $region50: #{tpu_custom_call.1} parent=1 // pred_check
      _
    $region51: #{tpu_custom_call.1} parent=1 // pred_check_branch
      %112 = sbr.rel (0) target = $region53
    $region52: #{tpu_custom_call.1} parent=1 // pred_region
      %114 = dma.done [#allocation12], 8192
    $region53: #{tpu_custom_call.1} parent=1 // pred_fallthru
      _
    %v115 = vld [vmem:[#allocation2] sm:$0xff]
    %v116 = vld [vmem:[#allocation5] sm:$0xff]
    %v117 = vld [vmem:[#allocation5 + $0x8] sm:$0xff]
    %v118 = vld [vmem:[#allocation5 + $0x10] sm:$0xff]
    %v119 = vld [vmem:[#allocation5 + $0x18] sm:$0xff]
    %v120 = vld [vmem:[#allocation5 + $0x20] sm:$0xff]
    %v121 = vld [vmem:[#allocation5 + $0x28] sm:$0xff]
    %v122 = vld [vmem:[#allocation5 + $0x30] sm:$0xff]
    %v123 = vld [vmem:[#allocation5 + $0x38] sm:$0xff]
    %v124 = vld [vmem:[#allocation5 + $0x40] sm:$0xff]
    %v125 = vld [vmem:[#allocation5 + $0x48] sm:$0xff]
    %v126 = vld [vmem:[#allocation5 + $0x50] sm:$0xff]
    %v127 = vld [vmem:[#allocation5 + $0x58] sm:$0xff]
    %v128 = vld [vmem:[#allocation5 + $0x60] sm:$0xff]
    %v129 = vld [vmem:[#allocation5 + $0x68] sm:$0xff]
    %v130 = vld [vmem:[#allocation5 + $0x70] sm:$0xff]
    %v131 = vld [vmem:[#allocation5 + $0x78] sm:$0xff]
    %v132 = vld [vmem:[#allocation5 + $0x80] sm:$0xff]
    %v133 = vld [vmem:[#allocation5 + $0x88] sm:$0xff]
    %v134 = vld [vmem:[#allocation5 + $0x90] sm:$0xff]
    %v135 = vld [vmem:[#allocation5 + $0x98] sm:$0xff]
    %v136 = vld [vmem:[#allocation5 + $0xa0] sm:$0xff]
    %v137 = vld [vmem:[#allocation5 + $0xa8] sm:$0xff]
    %v138 = vld [vmem:[#allocation5 + $0xb0] sm:$0xff]
    %v139 = vld [vmem:[#allocation5 + $0xb8] sm:$0xff]
    %v140 = vld [vmem:[#allocation5 + $0xc0] sm:$0xff]
    %v141 = vld [vmem:[#allocation5 + $0xc8] sm:$0xff]
    %v142 = vld [vmem:[#allocation5 + $0xd0] sm:$0xff]
    %v143 = vld [vmem:[#allocation5 + $0xd8] sm:$0xff]
    %v144 = vld [vmem:[#allocation5 + $0xe0] sm:$0xff]
    %v145 = vld [vmem:[#allocation5 + $0xe8] sm:$0xff]
    %v146 = vld [vmem:[#allocation5 + $0xf0] sm:$0xff]
    %v147 = vld [vmem:[#allocation5 + $0xf8] sm:$0xff]
    %v148 = vld [vmem:[#allocation5 + $0x100] sm:$0xff]
    %v149 = vld [vmem:[#allocation5 + $0x108] sm:$0xff]
    %v150 = vld [vmem:[#allocation5 + $0x110] sm:$0xff]
    %v151 = vld [vmem:[#allocation5 + $0x118] sm:$0xff]
    %v152 = vld [vmem:[#allocation5 + $0x120] sm:$0xff]
    %v153 = vld [vmem:[#allocation5 + $0x128] sm:$0xff]
    %v154 = vld [vmem:[#allocation5 + $0x130] sm:$0xff]
    %v155 = vld [vmem:[#allocation5 + $0x138] sm:$0xff]
    %v156 = vld [vmem:[#allocation5 + $0x140] sm:$0xff]
    %v157 = vld [vmem:[#allocation5 + $0x148] sm:$0xff]
    %v158 = vld [vmem:[#allocation5 + $0x150] sm:$0xff]
    %v159 = vld [vmem:[#allocation5 + $0x158] sm:$0xff]
    %v160 = vld [vmem:[#allocation5 + $0x160] sm:$0xff]
    %v161 = vld [vmem:[#allocation5 + $0x168] sm:$0xff]
    %v162 = vld [vmem:[#allocation5 + $0x170] sm:$0xff]
    %v163 = vld [vmem:[#allocation5 + $0x178] sm:$0xff]
    %v164 = vld [vmem:[#allocation5 + $0x180] sm:$0xff]
    %v165 = vld [vmem:[#allocation5 + $0x188] sm:$0xff]
    %v166 = vld [vmem:[#allocation5 + $0x190] sm:$0xff]
    %v167 = vld [vmem:[#allocation5 + $0x198] sm:$0xff]
    %v168 = vld [vmem:[#allocation5 + $0x1a0] sm:$0xff]
    %v169 = vld [vmem:[#allocation5 + $0x1a8] sm:$0xff]
    %v170 = vld [vmem:[#allocation5 + $0x1b0] sm:$0xff]
    %v171 = vld [vmem:[#allocation5 + $0x1b8] sm:$0xff]
    %v172 = vld [vmem:[#allocation5 + $0x1c0] sm:$0xff]
    %v173 = vld [vmem:[#allocation5 + $0x1c8] sm:$0xff]
    %v174 = vld [vmem:[#allocation5 + $0x1d0] sm:$0xff]
    %v175 = vld [vmem:[#allocation5 + $0x1d8] sm:$0xff]
    %v176 = vld [vmem:[#allocation5 + $0x1e0] sm:$0xff]
    %v177 = vld [vmem:[#allocation5 + $0x1e8] sm:$0xff]
    %v178 = vld [vmem:[#allocation5 + $0x1f0] sm:$0xff]
    %v179 = vld [vmem:[#allocation5 + $0x1f8] sm:$0xff]
    %v180 = vld [vmem:[#allocation7] sm:$0xf]
    %v182 = vperm.slane %v180, 0
    %v183 = vperm.slane %v180, 1
    %v184 = vperm.slane %v180, 2
    %v185 = vperm.slane %v180, 3
    %190 = vmatpush.msra.mxu0 %v176
    %191 = vmatpush.msra.mxu0 %v172
    %192 = vmatpush.msra.mxu0 %v168
    %193 = vmatpush.msra.mxu0 %v164
    %194 = vmatpush.msra.mxu0 %v160
    %195 = vmatpush.msra.mxu0 %v156
    %196 = vmatpush.msra.mxu0 %v152
    %197 = vmatpush.msra.mxu0 %v148
    %198 = vmatpush.msra.mxu0 %v144
    %199 = vmatpush.msra.mxu0 %v140
    %200 = vmatpush.msra.mxu0 %v136
    %201 = vmatpush.msra.mxu0 %v132
    %202 = vmatpush.msra.mxu0 %v128
    %203 = vmatpush.msra.mxu0 %v124
    %204 = vmatpush.msra.mxu0 %v120
    %205 = vmatpush.msra.mxu0 %v116
    %206 = vmatmul.f32.gmra.mxu0 %v115
    %v207 = vpop.f32.mrf.mxu0
    %v208 = vadd.f32 %v182, %v207
    %209 = vdwg.mxu0
    %210 = vmatpush.msra.mxu0 %v177
    %211 = vmatpush.msra.mxu0 %v173
    %212 = vmatpush.msra.mxu0 %v169
    %213 = vmatpush.msra.mxu0 %v165
    %214 = vmatpush.msra.mxu0 %v161
    %215 = vmatpush.msra.mxu0 %v157
    %216 = vmatpush.msra.mxu0 %v153
    %217 = vmatpush.msra.mxu0 %v149
    %218 = vmatpush.msra.mxu0 %v145
    %219 = vmatpush.msra.mxu0 %v141
    %220 = vmatpush.msra.mxu0 %v137
    %221 = vmatpush.msra.mxu0 %v133
    %222 = vmatpush.msra.mxu0 %v129
    %223 = vmatpush.msra.mxu0 %v125
    %224 = vmatpush.msra.mxu0 %v121
    %225 = vmatpush.msra.mxu0 %v117
    %226 = vmatmul.f32.gmra.mxu0 %v115
    %v227 = vpop.f32.mrf.mxu0
    %v228 = vadd.f32 %v183, %v227
    %229 = vdwg.mxu0
    %230 = vmatpush.msra.mxu0 %v178
    %231 = vmatpush.msra.mxu0 %v174
    %232 = vmatpush.msra.mxu0 %v170
    %233 = vmatpush.msra.mxu0 %v166
    %234 = vmatpush.msra.mxu0 %v162
    %235 = vmatpush.msra.mxu0 %v158
    %236 = vmatpush.msra.mxu0 %v154
    %237 = vmatpush.msra.mxu0 %v150
    %238 = vmatpush.msra.mxu0 %v146
    %239 = vmatpush.msra.mxu0 %v142
    %240 = vmatpush.msra.mxu0 %v138
    %241 = vmatpush.msra.mxu0 %v134
    %242 = vmatpush.msra.mxu0 %v130
    %243 = vmatpush.msra.mxu0 %v126
    %244 = vmatpush.msra.mxu0 %v122
    %245 = vmatpush.msra.mxu0 %v118
    %246 = vmatmul.f32.gmra.mxu0 %v115
    %v247 = vpop.f32.mrf.mxu0
    %v248 = vadd.f32 %v184, %v247
    %249 = vdwg.mxu0
    %250 = vmatpush.msra.mxu0 %v179
    %251 = vmatpush.msra.mxu0 %v175
    %252 = vmatpush.msra.mxu0 %v171
    %253 = vmatpush.msra.mxu0 %v167
    %254 = vmatpush.msra.mxu0 %v163
    %255 = vmatpush.msra.mxu0 %v159
    %256 = vmatpush.msra.mxu0 %v155
    %257 = vmatpush.msra.mxu0 %v151
    %258 = vmatpush.msra.mxu0 %v147
    %259 = vmatpush.msra.mxu0 %v143
    %260 = vmatpush.msra.mxu0 %v139
    %261 = vmatpush.msra.mxu0 %v135
    %262 = vmatpush.msra.mxu0 %v131
    %263 = vmatpush.msra.mxu0 %v127
    %264 = vmatpush.msra.mxu0 %v123
    %265 = vmatpush.msra.mxu0 %v119
    %266 = vmatmul.f32.gmra.mxu0 %v115
    %v267 = vpop.f32.mrf.mxu0
    %v268 = vadd.f32 %v185, %v267
    %269 = vdwg.mxu0
    %vm270 = vcmp.gt.f32.partialorder %v208, 0.0
    %vm271 = vcmp.gt.f32.partialorder %v228, 0.0
    %vm272 = vcmp.gt.f32.partialorder %v248, 0.0
    %vm273 = vcmp.gt.f32.partialorder %v268, 0.0
    %v274 = vmul.f32 %v208, 0.01
    %v275 = vmul.f32 %v228, 0.01
    %v276 = vmul.f32 %v248, 0.01
    %v277 = vmul.f32 %v268, 0.01
    %v278 = vsel %vm270, %v208, %v274
    %v279 = vsel %vm271, %v228, %v275
    %v280 = vsel %vm272, %v248, %v276
    %v281 = vsel %vm273, %v268, %v277
    %283 = vrot.lane.b32.xlu0 %v278, 72
    %v284 = vpop.permute.xlu0 %283
    %v286 = vadd.f32 %v278, %v284
    %288 = vrot.lane.b32.xlu0 %v278, 16
    %v289 = vpop.permute.xlu0 %288
    %290 = vrot.lane.b32.xlu0 %v279, 16
    %v291 = vpop.permute.xlu0 %290
    %vm292 = vcmask 130048
    %v293 = vsel %vm292, %v289, %v291
    %v295 = vadd.f32 %v286, %v293
    %296 = vrot.lane.b32.xlu0 %v279, 88
    %v297 = vpop.permute.xlu0 %296
    %v299 = vadd.f32 %v295, %v297
    %301 = vrot.lane.b32.xlu0 %v279, 32
    %v302 = vpop.permute.xlu0 %301
    %303 = vrot.lane.b32.xlu0 %v280, 32
    %v304 = vpop.permute.xlu0 %303
    %vm305 = vcmask 261120
    %v306 = vsel %vm305, %v302, %v304
    %v308 = vadd.f32 %v299, %v306
    %309 = vrot.lane.b32.xlu0 %v280, 104
    %v310 = vpop.permute.xlu0 %309
    %v312 = vadd.f32 %v308, %v310
    %314 = vrot.lane.b32.xlu0 %v280, 48
    %v315 = vpop.permute.xlu0 %314
    %316 = vrot.lane.b32.xlu0 %v281, 48
    %v317 = vpop.permute.xlu0 %316
    %vm318 = vcmask 392192
    %v319 = vsel %vm318, %v315, %v317
    %v321 = vadd.f32 %v312, %v319
    %322 = vrot.lane.b32.xlu0 %v281, 120
    %v323 = vpop.permute.xlu0 %322
    %v325 = vadd.f32 %v321, %v323
    %v326 = vmul.f32 %v325, 0.125
    %v327 = vld [vmem:[#allocation8] sm:$0xff]
    %v328 = vld [vmem:[#allocation8 + $0x8] sm:$0xff]
    %v329 = vld [vmem:[#allocation8 + $0x10] sm:$0xff]
    %v330 = vld [vmem:[#allocation8 + $0x18] sm:$0xff]
    %v331 = vld [vmem:[#allocation8 + $0x20] sm:$0xff]
    %v332 = vld [vmem:[#allocation8 + $0x28] sm:$0xff]
    %v333 = vld [vmem:[#allocation8 + $0x30] sm:$0xff]
    %v334 = vld [vmem:[#allocation8 + $0x38] sm:$0xff]
    %v335 = vld [vmem:[#allocation8 + $0x40] sm:$0xff]
    %v336 = vld [vmem:[#allocation8 + $0x48] sm:$0xff]
    %v337 = vld [vmem:[#allocation8 + $0x50] sm:$0xff]
    %v338 = vld [vmem:[#allocation8 + $0x58] sm:$0xff]
    %v339 = vld [vmem:[#allocation8 + $0x60] sm:$0xff]
    %v340 = vld [vmem:[#allocation8 + $0x68] sm:$0xff]
    %v341 = vld [vmem:[#allocation8 + $0x70] sm:$0xff]
    %v342 = vld [vmem:[#allocation8 + $0x78] sm:$0xff]
    %v343 = vld [vmem:[#allocation8 + $0x80] sm:$0xff]
    %v344 = vld [vmem:[#allocation8 + $0x88] sm:$0xff]
    %v345 = vld [vmem:[#allocation8 + $0x90] sm:$0xff]
    %v346 = vld [vmem:[#allocation8 + $0x98] sm:$0xff]
    %v347 = vld [vmem:[#allocation8 + $0xa0] sm:$0xff]
    %v348 = vld [vmem:[#allocation8 + $0xa8] sm:$0xff]
    %v349 = vld [vmem:[#allocation8 + $0xb0] sm:$0xff]
    %v350 = vld [vmem:[#allocation8 + $0xb8] sm:$0xff]
    %v351 = vld [vmem:[#allocation8 + $0xc0] sm:$0xff]
    %v352 = vld [vmem:[#allocation8 + $0xc8] sm:$0xff]
    %v353 = vld [vmem:[#allocation8 + $0xd0] sm:$0xff]
    %v354 = vld [vmem:[#allocation8 + $0xd8] sm:$0xff]
    %v355 = vld [vmem:[#allocation8 + $0xe0] sm:$0xff]
    %v356 = vld [vmem:[#allocation8 + $0xe8] sm:$0xff]
    %v357 = vld [vmem:[#allocation8 + $0xf0] sm:$0xff]
    %v358 = vld [vmem:[#allocation8 + $0xf8] sm:$0xff]
    %v359 = vld [vmem:[#allocation8 + $0x100] sm:$0xff]
    %v360 = vld [vmem:[#allocation8 + $0x108] sm:$0xff]
    %v361 = vld [vmem:[#allocation8 + $0x110] sm:$0xff]
    %v362 = vld [vmem:[#allocation8 + $0x118] sm:$0xff]
    %v363 = vld [vmem:[#allocation8 + $0x120] sm:$0xff]
    %v364 = vld [vmem:[#allocation8 + $0x128] sm:$0xff]
    %v365 = vld [vmem:[#allocation8 + $0x130] sm:$0xff]
    %v366 = vld [vmem:[#allocation8 + $0x138] sm:$0xff]
    %v367 = vld [vmem:[#allocation8 + $0x140] sm:$0xff]
    %v368 = vld [vmem:[#allocation8 + $0x148] sm:$0xff]
    %v369 = vld [vmem:[#allocation8 + $0x150] sm:$0xff]
    %v370 = vld [vmem:[#allocation8 + $0x158] sm:$0xff]
    %v371 = vld [vmem:[#allocation8 + $0x160] sm:$0xff]
    %v372 = vld [vmem:[#allocation8 + $0x168] sm:$0xff]
    %v373 = vld [vmem:[#allocation8 + $0x170] sm:$0xff]
    %v374 = vld [vmem:[#allocation8 + $0x178] sm:$0xff]
    %v375 = vld [vmem:[#allocation8 + $0x180] sm:$0xff]
    %v376 = vld [vmem:[#allocation8 + $0x188] sm:$0xff]
    %v377 = vld [vmem:[#allocation8 + $0x190] sm:$0xff]
    %v378 = vld [vmem:[#allocation8 + $0x198] sm:$0xff]
    %v379 = vld [vmem:[#allocation8 + $0x1a0] sm:$0xff]
    %v380 = vld [vmem:[#allocation8 + $0x1a8] sm:$0xff]
    %v381 = vld [vmem:[#allocation8 + $0x1b0] sm:$0xff]
    %v382 = vld [vmem:[#allocation8 + $0x1b8] sm:$0xff]
    %v383 = vld [vmem:[#allocation8 + $0x1c0] sm:$0xff]
    %v384 = vld [vmem:[#allocation8 + $0x1c8] sm:$0xff]
    %v385 = vld [vmem:[#allocation8 + $0x1d0] sm:$0xff]
    %v386 = vld [vmem:[#allocation8 + $0x1d8] sm:$0xff]
    %v387 = vld [vmem:[#allocation8 + $0x1e0] sm:$0xff]
    %v388 = vld [vmem:[#allocation8 + $0x1e8] sm:$0xff]
    %v389 = vld [vmem:[#allocation8 + $0x1f0] sm:$0xff]
    %v390 = vld [vmem:[#allocation8 + $0x1f8] sm:$0xff]
    %v391 = vld [vmem:[#allocation10] sm:$0xf]
    %v393 = vperm.slane %v391, 0
    %v394 = vperm.slane %v391, 1
    %v395 = vperm.slane %v391, 2
    %v396 = vperm.slane %v391, 3
    %401 = vmatpush.msra.mxu0 %v387
    %402 = vmatpush.msra.mxu0 %v383
    %403 = vmatpush.msra.mxu0 %v379
    %404 = vmatpush.msra.mxu0 %v375
    %405 = vmatpush.msra.mxu0 %v371
    %406 = vmatpush.msra.mxu0 %v367
    %407 = vmatpush.msra.mxu0 %v363
    %408 = vmatpush.msra.mxu0 %v359
    %409 = vmatpush.msra.mxu0 %v355
    %410 = vmatpush.msra.mxu0 %v351
    %411 = vmatpush.msra.mxu0 %v347
    %412 = vmatpush.msra.mxu0 %v343
    %413 = vmatpush.msra.mxu0 %v339
    %414 = vmatpush.msra.mxu0 %v335
    %415 = vmatpush.msra.mxu0 %v331
    %416 = vmatpush.msra.mxu0 %v327
    %417 = vmatmul.f32.gmra.mxu0 %v115
    %v418 = vpop.f32.mrf.mxu0
    %v419 = vadd.f32 %v393, %v418
    %420 = vdwg.mxu0
    %421 = vmatpush.msra.mxu0 %v388
    %422 = vmatpush.msra.mxu0 %v384
    %423 = vmatpush.msra.mxu0 %v380
    %424 = vmatpush.msra.mxu0 %v376
    %425 = vmatpush.msra.mxu0 %v372
    %426 = vmatpush.msra.mxu0 %v368
    %427 = vmatpush.msra.mxu0 %v364
    %428 = vmatpush.msra.mxu0 %v360
    %429 = vmatpush.msra.mxu0 %v356
    %430 = vmatpush.msra.mxu0 %v352
    %431 = vmatpush.msra.mxu0 %v348
    %432 = vmatpush.msra.mxu0 %v344
    %433 = vmatpush.msra.mxu0 %v340
    %434 = vmatpush.msra.mxu0 %v336
    %435 = vmatpush.msra.mxu0 %v332
    %436 = vmatpush.msra.mxu0 %v328
    %437 = vmatmul.f32.gmra.mxu0 %v115
    %v438 = vpop.f32.mrf.mxu0
    %v439 = vadd.f32 %v394, %v438
    %440 = vdwg.mxu0
    %441 = vmatpush.msra.mxu0 %v389
    %442 = vmatpush.msra.mxu0 %v385
    %443 = vmatpush.msra.mxu0 %v381
    %444 = vmatpush.msra.mxu0 %v377
    %445 = vmatpush.msra.mxu0 %v373
    %446 = vmatpush.msra.mxu0 %v369
    %447 = vmatpush.msra.mxu0 %v365
    %448 = vmatpush.msra.mxu0 %v361
    %449 = vmatpush.msra.mxu0 %v357
    %450 = vmatpush.msra.mxu0 %v353
    %451 = vmatpush.msra.mxu0 %v349
    %452 = vmatpush.msra.mxu0 %v345
    %453 = vmatpush.msra.mxu0 %v341
    %454 = vmatpush.msra.mxu0 %v337
    %455 = vmatpush.msra.mxu0 %v333
    %456 = vmatpush.msra.mxu0 %v329
    %457 = vmatmul.f32.gmra.mxu0 %v115
    %v458 = vpop.f32.mrf.mxu0
    %v459 = vadd.f32 %v395, %v458
    %460 = vdwg.mxu0
    %461 = vmatpush.msra.mxu0 %v390
    %462 = vmatpush.msra.mxu0 %v386
    %463 = vmatpush.msra.mxu0 %v382
    %464 = vmatpush.msra.mxu0 %v378
    %465 = vmatpush.msra.mxu0 %v374
    %466 = vmatpush.msra.mxu0 %v370
    %467 = vmatpush.msra.mxu0 %v366
    %468 = vmatpush.msra.mxu0 %v362
    %469 = vmatpush.msra.mxu0 %v358
    %470 = vmatpush.msra.mxu0 %v354
    %471 = vmatpush.msra.mxu0 %v350
    %472 = vmatpush.msra.mxu0 %v346
    %473 = vmatpush.msra.mxu0 %v342
    %474 = vmatpush.msra.mxu0 %v338
    %475 = vmatpush.msra.mxu0 %v334
    %476 = vmatpush.msra.mxu0 %v330
    %477 = vmatmul.f32.gmra.mxu0 %v115
    %v478 = vpop.f32.mrf.mxu0
    %v479 = vadd.f32 %v396, %v478
    %480 = vdwg.mxu0
    %vm481 = vcmp.gt.f32.partialorder %v419, 0.0
    %vm482 = vcmp.gt.f32.partialorder %v439, 0.0
    %vm483 = vcmp.gt.f32.partialorder %v459, 0.0
    %vm484 = vcmp.gt.f32.partialorder %v479, 0.0
    %v485 = vmul.f32 %v419, 0.01
    %v486 = vmul.f32 %v439, 0.01
    %v487 = vmul.f32 %v459, 0.01
    %v488 = vmul.f32 %v479, 0.01
    %v489 = vsel %vm481, %v419, %v485
    %v490 = vsel %vm482, %v439, %v486
    %v491 = vsel %vm483, %v459, %v487
    %v492 = vsel %vm484, %v479, %v488
    %494 = vrot.lane.b32.xlu0 %v489, 68
    %v495 = vpop.permute.xlu0 %494
    %v497 = vadd.f32 %v489, %v495
    %499 = vrot.lane.b32.xlu0 %v489, 8
    %v500 = vpop.permute.xlu0 %499
    %501 = vrot.lane.b32.xlu0 %v490, 8
    %v502 = vpop.permute.xlu0 %501
    %vm503 = vcmask 64512
    %v504 = vsel %vm503, %v500, %v502
    %v506 = vadd.f32 %v497, %v504
    %507 = vrot.lane.b32.xlu0 %v490, 76
    %v508 = vpop.permute.xlu0 %507
    %v510 = vadd.f32 %v506, %v508
    %512 = vrot.lane.b32.xlu0 %v490, 16
    %v513 = vpop.permute.xlu0 %512
    %514 = vrot.lane.b32.xlu0 %v491, 16
    %v515 = vpop.permute.xlu0 %514
    %v516 = vsel %vm292, %v513, %v515
    %v518 = vadd.f32 %v510, %v516
    %519 = vrot.lane.b32.xlu0 %v491, 84
    %v520 = vpop.permute.xlu0 %519
    %v522 = vadd.f32 %v518, %v520
    %524 = vrot.lane.b32.xlu0 %v491, 24
    %v525 = vpop.permute.xlu0 %524
    %526 = vrot.lane.b32.xlu0 %v492, 24
    %v527 = vpop.permute.xlu0 %526
    %vm528 = vcmask 195584
    %v529 = vsel %vm528, %v525, %v527
    %v531 = vadd.f32 %v522, %v529
    %532 = vrot.lane.b32.xlu0 %v492, 92
    %v533 = vpop.permute.xlu0 %532
    %v535 = vadd.f32 %v531, %v533
    %v536 = vmul.f32 %v535, 0.125
    %v537 = vld [vmem:[#allocation11] sm:$0xff]
    %v538 = vld [vmem:[#allocation11 + $0x8] sm:$0xff]
    %v539 = vld [vmem:[#allocation11 + $0x10] sm:$0xff]
    %v540 = vld [vmem:[#allocation11 + $0x18] sm:$0xff]
    %v541 = vld [vmem:[#allocation11 + $0x20] sm:$0xff]
    %v542 = vld [vmem:[#allocation11 + $0x28] sm:$0xff]
    %v543 = vld [vmem:[#allocation11 + $0x30] sm:$0xff]
    %v544 = vld [vmem:[#allocation11 + $0x38] sm:$0xff]
    %v545 = vld [vmem:[#allocation11 + $0x40] sm:$0xff]
    %v546 = vld [vmem:[#allocation11 + $0x48] sm:$0xff]
    %v547 = vld [vmem:[#allocation11 + $0x50] sm:$0xff]
    %v548 = vld [vmem:[#allocation11 + $0x58] sm:$0xff]
    %v549 = vld [vmem:[#allocation11 + $0x60] sm:$0xff]
    %v550 = vld [vmem:[#allocation11 + $0x68] sm:$0xff]
    %v551 = vld [vmem:[#allocation11 + $0x70] sm:$0xff]
    %v552 = vld [vmem:[#allocation11 + $0x78] sm:$0xff]
    %v553 = vld [vmem:[#allocation11 + $0x80] sm:$0xff]
    %v554 = vld [vmem:[#allocation11 + $0x88] sm:$0xff]
    %v555 = vld [vmem:[#allocation11 + $0x90] sm:$0xff]
    %v556 = vld [vmem:[#allocation11 + $0x98] sm:$0xff]
    %v557 = vld [vmem:[#allocation11 + $0xa0] sm:$0xff]
    %v558 = vld [vmem:[#allocation11 + $0xa8] sm:$0xff]
    %v559 = vld [vmem:[#allocation11 + $0xb0] sm:$0xff]
    %v560 = vld [vmem:[#allocation11 + $0xb8] sm:$0xff]
    %v561 = vld [vmem:[#allocation11 + $0xc0] sm:$0xff]
    %v562 = vld [vmem:[#allocation11 + $0xc8] sm:$0xff]
    %v563 = vld [vmem:[#allocation11 + $0xd0] sm:$0xff]
    %v564 = vld [vmem:[#allocation11 + $0xd8] sm:$0xff]
    %v565 = vld [vmem:[#allocation11 + $0xe0] sm:$0xff]
    %v566 = vld [vmem:[#allocation11 + $0xe8] sm:$0xff]
    %v567 = vld [vmem:[#allocation11 + $0xf0] sm:$0xff]
    %v568 = vld [vmem:[#allocation11 + $0xf8] sm:$0xff]
    %v569 = vld [vmem:[#allocation11 + $0x100] sm:$0xff]
    %v570 = vld [vmem:[#allocation11 + $0x108] sm:$0xff]
    %v571 = vld [vmem:[#allocation11 + $0x110] sm:$0xff]
    %v572 = vld [vmem:[#allocation11 + $0x118] sm:$0xff]
    %v573 = vld [vmem:[#allocation11 + $0x120] sm:$0xff]
    %v574 = vld [vmem:[#allocation11 + $0x128] sm:$0xff]
    %v575 = vld [vmem:[#allocation11 + $0x130] sm:$0xff]
    %v576 = vld [vmem:[#allocation11 + $0x138] sm:$0xff]
    %v577 = vld [vmem:[#allocation11 + $0x140] sm:$0xff]
    %v578 = vld [vmem:[#allocation11 + $0x148] sm:$0xff]
    %v579 = vld [vmem:[#allocation11 + $0x150] sm:$0xff]
    %v580 = vld [vmem:[#allocation11 + $0x158] sm:$0xff]
    %v581 = vld [vmem:[#allocation11 + $0x160] sm:$0xff]
    %v582 = vld [vmem:[#allocation11 + $0x168] sm:$0xff]
    %v583 = vld [vmem:[#allocation11 + $0x170] sm:$0xff]
    %v584 = vld [vmem:[#allocation11 + $0x178] sm:$0xff]
    %v585 = vld [vmem:[#allocation11 + $0x180] sm:$0xff]
    %v586 = vld [vmem:[#allocation11 + $0x188] sm:$0xff]
    %v587 = vld [vmem:[#allocation11 + $0x190] sm:$0xff]
    %v588 = vld [vmem:[#allocation11 + $0x198] sm:$0xff]
    %v589 = vld [vmem:[#allocation11 + $0x1a0] sm:$0xff]
    %v590 = vld [vmem:[#allocation11 + $0x1a8] sm:$0xff]
    %v591 = vld [vmem:[#allocation11 + $0x1b0] sm:$0xff]
    %v592 = vld [vmem:[#allocation11 + $0x1b8] sm:$0xff]
    %v593 = vld [vmem:[#allocation11 + $0x1c0] sm:$0xff]
    %v594 = vld [vmem:[#allocation11 + $0x1c8] sm:$0xff]
    %v595 = vld [vmem:[#allocation11 + $0x1d0] sm:$0xff]
    %v596 = vld [vmem:[#allocation11 + $0x1d8] sm:$0xff]
    %v597 = vld [vmem:[#allocation11 + $0x1e0] sm:$0xff]
    %v598 = vld [vmem:[#allocation11 + $0x1e8] sm:$0xff]
    %v599 = vld [vmem:[#allocation11 + $0x1f0] sm:$0xff]
    %v600 = vld [vmem:[#allocation11 + $0x1f8] sm:$0xff]
    %v601 = vld [vmem:[%s6] sm:$0xf]
    %v603 = vperm.slane %v601, 0
    %v604 = vperm.slane %v601, 1
    %v605 = vperm.slane %v601, 2
    %v606 = vperm.slane %v601, 3
    %611 = vmatpush.msra.mxu0 %v597
    %612 = vmatpush.msra.mxu0 %v593
    %613 = vmatpush.msra.mxu0 %v589
    %614 = vmatpush.msra.mxu0 %v585
    %615 = vmatpush.msra.mxu0 %v581
    %616 = vmatpush.msra.mxu0 %v577
    %617 = vmatpush.msra.mxu0 %v573
    %618 = vmatpush.msra.mxu0 %v569
    %619 = vmatpush.msra.mxu0 %v565
    %620 = vmatpush.msra.mxu0 %v561
    %621 = vmatpush.msra.mxu0 %v557
    %622 = vmatpush.msra.mxu0 %v553
    %623 = vmatpush.msra.mxu0 %v549
    %624 = vmatpush.msra.mxu0 %v545
    %625 = vmatpush.msra.mxu0 %v541
    %626 = vmatpush.msra.mxu0 %v537
    %627 = vmatmul.f32.gmra.mxu0 %v115
    %v628 = vpop.f32.mrf.mxu0
    %v629 = vadd.f32 %v603, %v628
    %630 = vdwg.mxu0
    %631 = vmatpush.msra.mxu0 %v598
    %632 = vmatpush.msra.mxu0 %v594
    %633 = vmatpush.msra.mxu0 %v590
    %634 = vmatpush.msra.mxu0 %v586
    %635 = vmatpush.msra.mxu0 %v582
    %636 = vmatpush.msra.mxu0 %v578
    %637 = vmatpush.msra.mxu0 %v574
    %638 = vmatpush.msra.mxu0 %v570
    %639 = vmatpush.msra.mxu0 %v566
    %640 = vmatpush.msra.mxu0 %v562
    %641 = vmatpush.msra.mxu0 %v558
    %642 = vmatpush.msra.mxu0 %v554
    %643 = vmatpush.msra.mxu0 %v550
    %644 = vmatpush.msra.mxu0 %v546
    %645 = vmatpush.msra.mxu0 %v542
    %646 = vmatpush.msra.mxu0 %v538
    %647 = vmatmul.f32.gmra.mxu0 %v115
    %v648 = vpop.f32.mrf.mxu0
    %v649 = vadd.f32 %v604, %v648
    %650 = vdwg.mxu0
    %651 = vmatpush.msra.mxu0 %v599
    %652 = vmatpush.msra.mxu0 %v595
    %653 = vmatpush.msra.mxu0 %v591
    %654 = vmatpush.msra.mxu0 %v587
    %655 = vmatpush.msra.mxu0 %v583
    %656 = vmatpush.msra.mxu0 %v579
    %657 = vmatpush.msra.mxu0 %v575
    %658 = vmatpush.msra.mxu0 %v571
    %659 = vmatpush.msra.mxu0 %v567
    %660 = vmatpush.msra.mxu0 %v563
    %661 = vmatpush.msra.mxu0 %v559
    %662 = vmatpush.msra.mxu0 %v555
    %663 = vmatpush.msra.mxu0 %v551
    %664 = vmatpush.msra.mxu0 %v547
    %665 = vmatpush.msra.mxu0 %v543
    %666 = vmatpush.msra.mxu0 %v539
    %667 = vmatmul.f32.gmra.mxu0 %v115
    %v668 = vpop.f32.mrf.mxu0
    %v669 = vadd.f32 %v605, %v668
    %670 = vdwg.mxu0
    %671 = vmatpush.msra.mxu0 %v600
    %672 = vmatpush.msra.mxu0 %v596
    %673 = vmatpush.msra.mxu0 %v592
    %674 = vmatpush.msra.mxu0 %v588
    %675 = vmatpush.msra.mxu0 %v584
    %676 = vmatpush.msra.mxu0 %v580
    %677 = vmatpush.msra.mxu0 %v576
    %678 = vmatpush.msra.mxu0 %v572
    %679 = vmatpush.msra.mxu0 %v568
    %680 = vmatpush.msra.mxu0 %v564
    %681 = vmatpush.msra.mxu0 %v560
    %682 = vmatpush.msra.mxu0 %v556
    %683 = vmatpush.msra.mxu0 %v552
    %684 = vmatpush.msra.mxu0 %v548
    %685 = vmatpush.msra.mxu0 %v544
    %686 = vmatpush.msra.mxu0 %v540
    %687 = vmatmul.f32.gmra.mxu0 %v115
    %v688 = vpop.f32.mrf.mxu0
    %v689 = vadd.f32 %v606, %v688
    %690 = vdwg.mxu0
    %vm691 = vcmp.gt.f32.partialorder %v629, 0.0
    %vm692 = vcmp.gt.f32.partialorder %v649, 0.0
    %vm693 = vcmp.gt.f32.partialorder %v669, 0.0
    %vm694 = vcmp.gt.f32.partialorder %v689, 0.0
    %v695 = vmul.f32 %v629, 0.01
    %v696 = vmul.f32 %v649, 0.01
    %v697 = vmul.f32 %v669, 0.01
    %v698 = vmul.f32 %v689, 0.01
    %v699 = vsel %vm691, %v629, %v695
    %v700 = vsel %vm692, %v649, %v696
    %v701 = vsel %vm693, %v669, %v697
    %v702 = vsel %vm694, %v689, %v698
    %704 = vrot.lane.b32.xlu0 %v699, 68
    %v705 = vpop.permute.xlu0 %704
    %v707 = vadd.f32 %v699, %v705
    %709 = vrot.lane.b32.xlu0 %v699, 8
    %v710 = vpop.permute.xlu0 %709
    %711 = vrot.lane.b32.xlu0 %v700, 8
    %v712 = vpop.permute.xlu0 %711
    %v713 = vsel %vm503, %v710, %v712
    %v715 = vadd.f32 %v707, %v713
    %716 = vrot.lane.b32.xlu0 %v700, 76
    %v717 = vpop.permute.xlu0 %716
    %v719 = vadd.f32 %v715, %v717
    %721 = vrot.lane.b32.xlu0 %v700, 16
    %v722 = vpop.permute.xlu0 %721
    %723 = vrot.lane.b32.xlu0 %v701, 16
    %v724 = vpop.permute.xlu0 %723
    %v725 = vsel %vm292, %v722, %v724
    %v727 = vadd.f32 %v719, %v725
    %728 = vrot.lane.b32.xlu0 %v701, 84
    %v729 = vpop.permute.xlu0 %728
    %v731 = vadd.f32 %v727, %v729
    %733 = vrot.lane.b32.xlu0 %v701, 24
    %v734 = vpop.permute.xlu0 %733
    %735 = vrot.lane.b32.xlu0 %v702, 24
    %v736 = vpop.permute.xlu0 %735
    %v737 = vsel %vm528, %v734, %v736
    %v739 = vadd.f32 %v731, %v737
    %740 = vrot.lane.b32.xlu0 %v702, 92
    %v741 = vpop.permute.xlu0 %740
    %v743 = vadd.f32 %v739, %v741
    %v744 = vmul.f32 %v743, 0.125
    %746 = vrot.lane.b32.xlu0 %v536, 56
    %v747 = vpop.permute.xlu0 %746
    %750 = vrot.lane.b32.xlu0 %v744, 116
    %v751 = vpop.permute.xlu0 %750
    %vm753 = vcmask 457728
    %v754 = vsel %vm753, %v326, %v747
    %vm755 = vcmask 949248
    %v756 = vsel %vm755, %v754, %v751
    %757 = vst [vmem:[#allocation13] sm:$0xff] %v756
    %758 = vst.msk [vmem:[#allocation13 + $0x8] sm:$0xff] %vm318, %v751
    // Predicated region
    $region54: #{tpu_custom_call.1} parent=1 // pred_check
      _
    $region55: #{tpu_custom_call.1} parent=1 // pred_check_branch
      %760 = sbr.rel (0) target = $region57
    $region56: #{tpu_custom_call.1} parent=1 // pred_region
      %762 = vsyncadd [#allocation4], 0
      %s764 = sshll.u32 [#allocation13], 4
      %s765 = int_to_ptr.vmem [resolvable:$true] %s764
      %s766 = sshll.u32 %s7, 4
      %s767 = int_to_ptr.hbm [resolvable:$true] %s766
      %769 = dma.vmem_to_hbm [thread:$0]  %s765, 256, %s767, [#allocation4]
    $region57: #{tpu_custom_call.1} parent=1 // pred_fallthru
      _
    // Predicated region
    $region58: #{tpu_custom_call.1} parent=1 // pred_check
      _
    $region59: #{tpu_custom_call.1} parent=1 // pred_check_branch
      %771 = sbr.rel (0) target = $region61
    $region60: #{tpu_custom_call.1} parent=1 // pred_region
      %773 = dma.done [#allocation4], 256
    $region61: #{tpu_custom_call.1} parent=1 // pred_fallthru
      _
    %774 = vsyncpa [#allocation3], 1
    %775 = vsyncpa [#allocation6], 1
    %776 = vsyncpa [#allocation9], 1
    %777 = vsyncpa [#allocation12], 1
    %778 = vsyncpa [#allocation4], 1

</llo_original>
